<compile_context>
chip_gen: v7x
topology: tpu7x:2x2x1
jax: 0.10.0
libtpu: 0.0.40
codegen_flags: <defaults>
</compile_context>

<pallas_src>
import functools

import jax
import jax.numpy as jnp
from jax.experimental import pallas as pl
from jax.experimental.pallas import tpu as pltpu

# ---------------- model hyper-parameters (small, deterministic) --------------
VOCAB = 50          # embedding vocabulary
B = 2               # batch
M = 8               # number of memory slots
S = 6               # sentence (tokens per memory / query)
D = 128             # embedding / hidden dim
HOPS = 3            # memory hops
NUM_CLASSES = 16    # classifier output dim
V_PAD = 128         # vocab padded to MXU-friendly width
NC_PAD = 128        # lane-dense classifier width inside the kernel


# ------------------------------- Pallas kernel -------------------------------
def memnn_kernel(x_ref, q_ref,                       # (B*M, S) / (B, S) int32 VMEM
                 emb_a_ref, emb_b_ref, emb_c_ref,    # (V_PAD, D) f32 VMEM tables
                 h_ref, w_ref,                       # (D, D) / (D, NC_PAD) f32
                 out_ref,                            # (B, NC_PAD) f32
                 *, hops, batch, mems):
    bm, sent = x_ref.shape
    vpad, d = emb_a_ref.shape

    x_tok = x_ref[...]                               # (B*M, S) int32
    q_tok = q_ref[...]                               # (B, S)   int32

    # ---- bag-of-words as a count matrix (VPU iota-compare + add) -------------
    iota_x = jax.lax.broadcasted_iota(jnp.int32, (bm, vpad), 1)
    iota_q = jax.lax.broadcasted_iota(jnp.int32, (batch, vpad), 1)
    counts_x = jnp.zeros((bm, vpad), jnp.int32)
    counts_q = jnp.zeros((batch, vpad), jnp.int32)
    for s in range(sent):                            # S small, static unroll
        counts_x = counts_x + (x_tok[:, s:s + 1] == iota_x).astype(jnp.int32)
        counts_q = counts_q + (q_tok[:, s:s + 1] == iota_q).astype(jnp.int32)
    counts_xf = counts_x.astype(jnp.float32)         # (B*M, V_PAD)
    counts_qf = counts_q.astype(jnp.float32)         # (B,   V_PAD)

    # ---- encoder: three dense MXU matmuls (counts @ embedding tables) --------
    emb_a = emb_a_ref[...]
    emb_b = emb_b_ref[...]
    emb_c = emb_c_ref[...]
    m_flat = jnp.dot(counts_xf, emb_a, preferred_element_type=jnp.float32)  # (B*M, D)
    c_flat = jnp.dot(counts_xf, emb_c, preferred_element_type=jnp.float32)  # (B*M, D)
    u = jnp.dot(counts_qf, emb_b, preferred_element_type=jnp.float32)       # (B, D)

    m3 = m_flat.reshape(batch, mems, d)              # (B, M, D), stays in vregs
    c3 = c_flat.reshape(batch, mems, d)

    Hm = h_ref[...]                                  # (D, D)       f32
    Wm = w_ref[...]                                  # (D, NC_PAD)  f32

    # ---- multi-hop attention (whole batch, f32 throughout) -------------------
    for _ in range(hops):                            # static unroll (small, fixed)
        # attention scores on VPU/XLU: scores[b,m] = sum_d u[b,d] * m3[b,m,d]
        scores = jnp.sum(u[:, None, :] * m3, axis=-1, keepdims=True)   # (B, M, 1)
        scores = scores - jnp.max(scores, axis=1, keepdims=True)
        p = jnp.exp(scores)
        p = p * pl.reciprocal(jnp.sum(p, axis=1, keepdims=True), approx=True)
        # weighted read on VPU: o[b,d] = sum_m p[b,m] * c3[b,m,d]
        o = jnp.sum(p * c3, axis=1)                                    # (B, D)
        # hop update: batched MXU matmul, f32 accumulation
        u = jnp.dot(u, Hm, preferred_element_type=jnp.float32) + o     # (B, D)

    # classifier: batched MXU matmul, lane-dense (B, 128) store
    out_ref[...] = jnp.dot(u, Wm, preferred_element_type=jnp.float32)


# ---------------------- one-time parameter preparation -----------------------
def prepare_params(emb_A, emb_B, emb_C, H, W):
    """Hoisted out of the per-call path: vocab / class zero-padding + f32 cast."""
    V, Dd = emb_A.shape
    NC = W.shape[1]
    pad_tbl = lambda t: jnp.zeros((V_PAD, Dd), jnp.float32).at[:V].set(
        t.astype(jnp.float32))
    emb_A_p = pad_tbl(emb_A)
    emb_B_p = pad_tbl(emb_B)
    emb_C_p = pad_tbl(emb_C)
    H_p = H.astype(jnp.float32)
    W_p = jnp.zeros((Dd, NC_PAD), jnp.float32).at[:, :NC].set(
        W.astype(jnp.float32))
    return emb_A_p, emb_B_p, emb_C_p, H_p, W_p


def memnn_pallas(x, q, emb_A_p, emb_B_p, emb_C_p, H_p, W_p,
                 *, num_classes=NUM_CLASSES, hops=HOPS):
    """x: (B,M,S) int   q: (B,S) int   prepared params   ->  logits (B, NC) f32."""
    Bb, Mm, Ss = x.shape
    Vp, Dd = emb_A_p.shape

    x2 = x.reshape(Bb * Mm, Ss).astype(jnp.int32)    # (B*M, S) int32 (VMEM input)
    q2 = q.astype(jnp.int32)                         # (B, S)   int32 (VMEM input)

    out = pl.pallas_call(
        functools.partial(memnn_kernel, hops=hops, batch=Bb, mems=Mm),
        out_shape=jax.ShapeDtypeStruct((Bb, NC_PAD), jnp.float32),
        grid_spec=pltpu.PrefetchScalarGridSpec(
            num_scalar_prefetch=0,
            grid=(1,),                               # whole problem in one step
            in_specs=[
                pl.BlockSpec((Bb * Mm, Ss), lambda i: (0, 0)),   # x token ids
                pl.BlockSpec((Bb, Ss), lambda i: (0, 0)),        # q token ids
                pl.BlockSpec((Vp, Dd), lambda i: (0, 0)),        # emb_A
                pl.BlockSpec((Vp, Dd), lambda i: (0, 0)),        # emb_B
                pl.BlockSpec((Vp, Dd), lambda i: (0, 0)),        # emb_C
                pl.BlockSpec((Dd, Dd), lambda i: (0, 0)),        # H
                pl.BlockSpec((Dd, NC_PAD), lambda i: (0, 0)),    # W (padded)
            ],
            out_specs=pl.BlockSpec((Bb, NC_PAD), lambda i: (0, 0)),
        ),
        compiler_params=pltpu.CompilerParams(
            dimension_semantics=("arbitrary",)),     # single µs-scale step
    )(x2, q2, emb_A_p, emb_B_p, emb_C_p, H_p, W_p)
    return out[:, :num_classes]


# ------------------------------ pure-JAX reference ---------------------------
def memnn_ref(x, q, emb_A, emb_B, emb_C, H, W, *, hops=HOPS):
    m = jnp.take(emb_A, x, axis=0).sum(axis=2)   # (B, M, D)
    c = jnp.take(emb_C, x, axis=0).sum(axis=2)   # (B, M, D)
    u = jnp.take(emb_B, q, axis=0).sum(axis=1)   # (B, D)
    for _ in range(hops):
        scores = jnp.einsum("bd,bmd->bm", u, m)
        p = jax.nn.softmax(scores, axis=-1)
        o = jnp.einsum("bm,bmd->bd", p, c)
        u = u @ H + o
    return u @ W


# ----------------------------------- main -------------------------------------
if __name__ == "__main__":
    key = jax.random.PRNGKey(0)
    k_x, k_q, k_a, k_b, k_c, k_h, k_w = jax.random.split(key, 7)

    # integer token inputs (stories x and query q), as in the PyTorch module
    x = jax.random.randint(k_x, (B, M, S), 0, VOCAB)   # memories
    q = jax.random.randint(k_q, (B, S), 0, VOCAB)      # query

    # deterministic synthetic parameters (shapes implied by a MemNN encoder/classifier)
    # TODO(synk): exact MemNNEncoder/Classifier internals (position/temporal encoding,
    # dropout) are not in the provided source; bag-of-words + linear head is used.
    emb_A = 0.1 * jax.random.normal(k_a, (VOCAB, D), jnp.float32)
    emb_B = 0.1 * jax.random.normal(k_b, (VOCAB, D), jnp.float32)
    emb_C = 0.1 * jax.random.normal(k_c, (VOCAB, D), jnp.float32)
    H = 0.1 * jax.random.normal(k_h, (D, D), jnp.float32)
    W = 0.1 * jax.random.normal(k_w, (D, NUM_CLASSES), jnp.float32)

    # one-time parameter prep (hoisted out of the per-call path)
    params = prepare_params(emb_A, emb_B, emb_C, H, W)
    params = jax.block_until_ready(params)

    logits = memnn_pallas(x, q, *params)
    logits = jax.block_until_ready(logits)

    ref = memnn_ref(x, q, emb_A, emb_B, emb_C, H, W)
    assert logits.shape == (B, NUM_CLASSES)
    # remaining approximation sources: MXU default matmul precision and the EUP
    # approx reciprocal in the softmax (typical error is far below this bound).
    err = jnp.max(jnp.abs(logits - ref))
    assert jnp.allclose(logits, ref, atol=2e-2, rtol=2e-2), f"max abs err {err}"

    print("KERNEL_OK")
</pallas_src>

<mosaic_0001>
module attributes {stable_mosaic.version = 11 : i64} {
  func.func @memnn_kernel(%arg0: i32, %arg1: memref<16x6xi32, #tpu.memory_space<vmem>>, %arg2: memref<2x6xi32, #tpu.memory_space<vmem>>, %arg3: memref<128x128xf32, #tpu.memory_space<vmem>>, %arg4: memref<128x128xf32, #tpu.memory_space<vmem>>, %arg5: memref<128x128xf32, #tpu.memory_space<vmem>>, %arg6: memref<128x128xf32, #tpu.memory_space<vmem>>, %arg7: memref<128x128xf32, #tpu.memory_space<vmem>>, %arg8: memref<2x128xf32, #tpu.memory_space<vmem>>) attributes {dimension_semantics = [#tpu.dimension_semantics<arbitrary>], iteration_bounds = array<i64: 1>, scalar_prefetch = 0 : i64, scratch_operands = 0 : i64, tpu.core_type = #tpu.core_type<tc>, window_params = [{pipeline_mode = #tpu.pipeline_mode<synchronous>, transform_indices = @transform_0, window_bounds = array<i64: 16, 6>}, {pipeline_mode = #tpu.pipeline_mode<synchronous>, transform_indices = @transform_1, window_bounds = array<i64: 2, 6>}, {pipeline_mode = #tpu.pipeline_mode<synchronous>, transform_indices = @transform_2, window_bounds = array<i64: 128, 128>}, {pipeline_mode = #tpu.pipeline_mode<synchronous>, transform_indices = @transform_3, window_bounds = array<i64: 128, 128>}, {pipeline_mode = #tpu.pipeline_mode<synchronous>, transform_indices = @transform_4, window_bounds = array<i64: 128, 128>}, {pipeline_mode = #tpu.pipeline_mode<synchronous>, transform_indices = @transform_5, window_bounds = array<i64: 128, 128>}, {pipeline_mode = #tpu.pipeline_mode<synchronous>, transform_indices = @transform_6, window_bounds = array<i64: 128, 128>}, {pipeline_mode = #tpu.pipeline_mode<synchronous>, transform_indices = @transform_7, window_bounds = array<i64: 2, 128>}]} {
    %c0 = arith.constant 0 : index
    %c0_0 = arith.constant 0 : index
    %0 = vector.load %arg1[%c0, %c0_0] : memref<16x6xi32, #tpu.memory_space<vmem>>, vector<16x6xi32>
    %c0_1 = arith.constant 0 : index
    %c0_2 = arith.constant 0 : index
    %1 = vector.load %arg2[%c0_1, %c0_2] : memref<2x6xi32, #tpu.memory_space<vmem>>, vector<2x6xi32>
    %2 = tpu.iota {dimensions = array<i32: 1>} : vector<16x128xi32>
    %3 = tpu.iota {dimensions = array<i32: 1>} : vector<2x128xi32>
    %c0_i32 = arith.constant 0 : i32
    %4 = vector.broadcast %c0_i32 : i32 to vector<16x128xi32>
    %c0_i32_3 = arith.constant 0 : i32
    %5 = vector.broadcast %c0_i32_3 : i32 to vector<2x128xi32>
    %6 = vector.extract_strided_slice %0 {offsets = [0, 0], sizes = [16, 1], strides = [1, 1]} : vector<16x6xi32> to vector<16x1xi32>
    %7 = vector.broadcast %6 : vector<16x1xi32> to vector<16x128xi32>
    %8 = arith.cmpi eq, %7, %2 : vector<16x128xi32>
    %9 = arith.extui %8 : vector<16x128xi1> to vector<16x128xi32>
    %10 = arith.addi %4, %9 : vector<16x128xi32>
    %11 = vector.extract_strided_slice %1 {offsets = [0, 0], sizes = [2, 1], strides = [1, 1]} : vector<2x6xi32> to vector<2x1xi32>
    %12 = vector.broadcast %11 : vector<2x1xi32> to vector<2x128xi32>
    %13 = arith.cmpi eq, %12, %3 : vector<2x128xi32>
    %14 = arith.extui %13 : vector<2x128xi1> to vector<2x128xi32>
    %15 = arith.addi %5, %14 : vector<2x128xi32>
    %16 = vector.extract_strided_slice %0 {offsets = [0, 1], sizes = [16, 1], strides = [1, 1]} : vector<16x6xi32> to vector<16x1xi32>
    %17 = vector.broadcast %16 : vector<16x1xi32> to vector<16x128xi32>
    %18 = arith.cmpi eq, %17, %2 : vector<16x128xi32>
    %19 = arith.extui %18 : vector<16x128xi1> to vector<16x128xi32>
    %20 = arith.addi %10, %19 : vector<16x128xi32>
    %21 = vector.extract_strided_slice %1 {offsets = [0, 1], sizes = [2, 1], strides = [1, 1]} : vector<2x6xi32> to vector<2x1xi32>
    %22 = vector.broadcast %21 : vector<2x1xi32> to vector<2x128xi32>
    %23 = arith.cmpi eq, %22, %3 : vector<2x128xi32>
    %24 = arith.extui %23 : vector<2x128xi1> to vector<2x128xi32>
    %25 = arith.addi %15, %24 : vector<2x128xi32>
    %26 = vector.extract_strided_slice %0 {offsets = [0, 2], sizes = [16, 1], strides = [1, 1]} : vector<16x6xi32> to vector<16x1xi32>
    %27 = vector.broadcast %26 : vector<16x1xi32> to vector<16x128xi32>
    %28 = arith.cmpi eq, %27, %2 : vector<16x128xi32>
    %29 = arith.extui %28 : vector<16x128xi1> to vector<16x128xi32>
    %30 = arith.addi %20, %29 : vector<16x128xi32>
    %31 = vector.extract_strided_slice %1 {offsets = [0, 2], sizes = [2, 1], strides = [1, 1]} : vector<2x6xi32> to vector<2x1xi32>
    %32 = vector.broadcast %31 : vector<2x1xi32> to vector<2x128xi32>
    %33 = arith.cmpi eq, %32, %3 : vector<2x128xi32>
    %34 = arith.extui %33 : vector<2x128xi1> to vector<2x128xi32>
    %35 = arith.addi %25, %34 : vector<2x128xi32>
    %36 = vector.extract_strided_slice %0 {offsets = [0, 3], sizes = [16, 1], strides = [1, 1]} : vector<16x6xi32> to vector<16x1xi32>
    %37 = vector.broadcast %36 : vector<16x1xi32> to vector<16x128xi32>
    %38 = arith.cmpi eq, %37, %2 : vector<16x128xi32>
    %39 = arith.extui %38 : vector<16x128xi1> to vector<16x128xi32>
    %40 = arith.addi %30, %39 : vector<16x128xi32>
    %41 = vector.extract_strided_slice %1 {offsets = [0, 3], sizes = [2, 1], strides = [1, 1]} : vector<2x6xi32> to vector<2x1xi32>
    %42 = vector.broadcast %41 : vector<2x1xi32> to vector<2x128xi32>
    %43 = arith.cmpi eq, %42, %3 : vector<2x128xi32>
    %44 = arith.extui %43 : vector<2x128xi1> to vector<2x128xi32>
    %45 = arith.addi %35, %44 : vector<2x128xi32>
    %46 = vector.extract_strided_slice %0 {offsets = [0, 4], sizes = [16, 1], strides = [1, 1]} : vector<16x6xi32> to vector<16x1xi32>
    %47 = vector.broadcast %46 : vector<16x1xi32> to vector<16x128xi32>
    %48 = arith.cmpi eq, %47, %2 : vector<16x128xi32>
    %49 = arith.extui %48 : vector<16x128xi1> to vector<16x128xi32>
    %50 = arith.addi %40, %49 : vector<16x128xi32>
    %51 = vector.extract_strided_slice %1 {offsets = [0, 4], sizes = [2, 1], strides = [1, 1]} : vector<2x6xi32> to vector<2x1xi32>
    %52 = vector.broadcast %51 : vector<2x1xi32> to vector<2x128xi32>
    %53 = arith.cmpi eq, %52, %3 : vector<2x128xi32>
    %54 = arith.extui %53 : vector<2x128xi1> to vector<2x128xi32>
    %55 = arith.addi %45, %54 : vector<2x128xi32>
    %56 = vector.extract_strided_slice %0 {offsets = [0, 5], sizes = [16, 1], strides = [1, 1]} : vector<16x6xi32> to vector<16x1xi32>
    %57 = vector.broadcast %56 : vector<16x1xi32> to vector<16x128xi32>
    %58 = arith.cmpi eq, %57, %2 : vector<16x128xi32>
    %59 = arith.extui %58 : vector<16x128xi1> to vector<16x128xi32>
    %60 = arith.addi %50, %59 : vector<16x128xi32>
    %61 = vector.extract_strided_slice %1 {offsets = [0, 5], sizes = [2, 1], strides = [1, 1]} : vector<2x6xi32> to vector<2x1xi32>
    %62 = vector.broadcast %61 : vector<2x1xi32> to vector<2x128xi32>
    %63 = arith.cmpi eq, %62, %3 : vector<2x128xi32>
    %64 = arith.extui %63 : vector<2x128xi1> to vector<2x128xi32>
    %65 = arith.addi %55, %64 : vector<2x128xi32>
    %66 = arith.sitofp %60 : vector<16x128xi32> to vector<16x128xf32>
    %67 = arith.sitofp %65 : vector<2x128xi32> to vector<2x128xf32>
    %c0_4 = arith.constant 0 : index
    %c0_5 = arith.constant 0 : index
    %68 = vector.load %arg3[%c0_4, %c0_5] : memref<128x128xf32, #tpu.memory_space<vmem>>, vector<128x128xf32>
    %c0_6 = arith.constant 0 : index
    %c0_7 = arith.constant 0 : index
    %69 = vector.load %arg4[%c0_6, %c0_7] : memref<128x128xf32, #tpu.memory_space<vmem>>, vector<128x128xf32>
    %c0_8 = arith.constant 0 : index
    %c0_9 = arith.constant 0 : index
    %70 = vector.load %arg5[%c0_8, %c0_9] : memref<128x128xf32, #tpu.memory_space<vmem>>, vector<128x128xf32>
    %cst = arith.constant dense<0.000000e+00> : vector<16x128xf32>
    %71 = tpu.matmul %66, %68, %cst {dimension_numbers = #tpu.dot_dimension_numbers<[1], [0], [0], [1], [0, 0, 1, 1], [], []>} : vector<16x128xf32>, vector<128x128xf32>, vector<16x128xf32> -> vector<16x128xf32>
    %cst_10 = arith.constant dense<0.000000e+00> : vector<16x128xf32>
    %72 = tpu.matmul %66, %70, %cst_10 {dimension_numbers = #tpu.dot_dimension_numbers<[1], [0], [0], [1], [0, 0, 1, 1], [], []>} : vector<16x128xf32>, vector<128x128xf32>, vector<16x128xf32> -> vector<16x128xf32>
    %cst_11 = arith.constant dense<0.000000e+00> : vector<2x128xf32>
    %73 = tpu.matmul %67, %69, %cst_11 {dimension_numbers = #tpu.dot_dimension_numbers<[1], [0], [0], [1], [0, 0, 1, 1], [], []>} : vector<2x128xf32>, vector<128x128xf32>, vector<2x128xf32> -> vector<2x128xf32>
    %74 = vector.shape_cast %71 : vector<16x128xf32> to vector<2x8x128xf32>
    %75 = vector.shape_cast %72 : vector<16x128xf32> to vector<2x8x128xf32>
    %c0_12 = arith.constant 0 : index
    %c0_13 = arith.constant 0 : index
    %76 = vector.load %arg6[%c0_12, %c0_13] : memref<128x128xf32, #tpu.memory_space<vmem>>, vector<128x128xf32>
    %c0_14 = arith.constant 0 : index
    %c0_15 = arith.constant 0 : index
    %77 = vector.load %arg7[%c0_14, %c0_15] : memref<128x128xf32, #tpu.memory_space<vmem>>, vector<128x128xf32>
    %78 = vector.shape_cast %73 : vector<2x128xf32> to vector<2x1x128xf32>
    %79 = vector.broadcast %78 : vector<2x1x128xf32> to vector<2x8x128xf32>
    %80 = arith.mulf %79, %74 : vector<2x8x128xf32>
    %cst_16 = arith.constant dense<0.000000e+00> : vector<2x8xf32>
    %81 = vector.multi_reduction <add>, %80, %cst_16 [2] : vector<2x8x128xf32> to vector<2x8xf32>
    %82 = vector.shape_cast %81 : vector<2x8xf32> to vector<2x8x1xf32>
    %cst_17 = arith.constant dense<0xFF800000> : vector<2x1xf32>
    %83 = vector.multi_reduction <maximumf>, %82, %cst_17 [1] : vector<2x8x1xf32> to vector<2x1xf32>
    %84 = vector.shape_cast %83 : vector<2x1xf32> to vector<2x1x1xf32>
    %85 = vector.broadcast %84 : vector<2x1x1xf32> to vector<2x8x1xf32>
    %86 = arith.subf %82, %85 : vector<2x8x1xf32>
    %87 = math.exp %86 : vector<2x8x1xf32>
    %cst_18 = arith.constant dense<0.000000e+00> : vector<2x1xf32>
    %88 = vector.multi_reduction <add>, %87, %cst_18 [1] : vector<2x8x1xf32> to vector<2x1xf32>
    %89 = vector.shape_cast %88 : vector<2x1xf32> to vector<2x1x1xf32>
    %90 = tpu.reciprocal %89 {approx = true} : vector<2x1x1xf32> -> vector<2x1x1xf32>
    %91 = vector.broadcast %90 : vector<2x1x1xf32> to vector<2x8x1xf32>
    %92 = arith.mulf %87, %91 : vector<2x8x1xf32>
    %93 = vector.broadcast %92 : vector<2x8x1xf32> to vector<2x8x128xf32>
    %94 = arith.mulf %93, %75 : vector<2x8x128xf32>
    %cst_19 = arith.constant dense<0.000000e+00> : vector<2x128xf32>
    %95 = vector.multi_reduction <add>, %94, %cst_19 [1] : vector<2x8x128xf32> to vector<2x128xf32>
    %cst_20 = arith.constant dense<0.000000e+00> : vector<2x128xf32>
    %96 = tpu.matmul %73, %76, %cst_20 {dimension_numbers = #tpu.dot_dimension_numbers<[1], [0], [0], [1], [0, 0, 1, 1], [], []>} : vector<2x128xf32>, vector<128x128xf32>, vector<2x128xf32> -> vector<2x128xf32>
    %97 = arith.addf %96, %95 : vector<2x128xf32>
    %98 = vector.shape_cast %97 : vector<2x128xf32> to vector<2x1x128xf32>
    %99 = vector.broadcast %98 : vector<2x1x128xf32> to vector<2x8x128xf32>
    %100 = arith.mulf %99, %74 : vector<2x8x128xf32>
    %cst_21 = arith.constant dense<0.000000e+00> : vector<2x8xf32>
    %101 = vector.multi_reduction <add>, %100, %cst_21 [2] : vector<2x8x128xf32> to vector<2x8xf32>
    %102 = vector.shape_cast %101 : vector<2x8xf32> to vector<2x8x1xf32>
    %cst_22 = arith.constant dense<0xFF800000> : vector<2x1xf32>
    %103 = vector.multi_reduction <maximumf>, %102, %cst_22 [1] : vector<2x8x1xf32> to vector<2x1xf32>
    %104 = vector.shape_cast %103 : vector<2x1xf32> to vector<2x1x1xf32>
    %105 = vector.broadcast %104 : vector<2x1x1xf32> to vector<2x8x1xf32>
    %106 = arith.subf %102, %105 : vector<2x8x1xf32>
    %107 = math.exp %106 : vector<2x8x1xf32>
    %cst_23 = arith.constant dense<0.000000e+00> : vector<2x1xf32>
    %108 = vector.multi_reduction <add>, %107, %cst_23 [1] : vector<2x8x1xf32> to vector<2x1xf32>
    %109 = vector.shape_cast %108 : vector<2x1xf32> to vector<2x1x1xf32>
    %110 = tpu.reciprocal %109 {approx = true} : vector<2x1x1xf32> -> vector<2x1x1xf32>
    %111 = vector.broadcast %110 : vector<2x1x1xf32> to vector<2x8x1xf32>
    %112 = arith.mulf %107, %111 : vector<2x8x1xf32>
    %113 = vector.broadcast %112 : vector<2x8x1xf32> to vector<2x8x128xf32>
    %114 = arith.mulf %113, %75 : vector<2x8x128xf32>
    %cst_24 = arith.constant dense<0.000000e+00> : vector<2x128xf32>
    %115 = vector.multi_reduction <add>, %114, %cst_24 [1] : vector<2x8x128xf32> to vector<2x128xf32>
    %cst_25 = arith.constant dense<0.000000e+00> : vector<2x128xf32>
    %116 = tpu.matmul %97, %76, %cst_25 {dimension_numbers = #tpu.dot_dimension_numbers<[1], [0], [0], [1], [0, 0, 1, 1], [], []>} : vector<2x128xf32>, vector<128x128xf32>, vector<2x128xf32> -> vector<2x128xf32>
    %117 = arith.addf %116, %115 : vector<2x128xf32>
    %118 = vector.shape_cast %117 : vector<2x128xf32> to vector<2x1x128xf32>
    %119 = vector.broadcast %118 : vector<2x1x128xf32> to vector<2x8x128xf32>
    %120 = arith.mulf %119, %74 : vector<2x8x128xf32>
    %cst_26 = arith.constant dense<0.000000e+00> : vector<2x8xf32>
    %121 = vector.multi_reduction <add>, %120, %cst_26 [2] : vector<2x8x128xf32> to vector<2x8xf32>
    %122 = vector.shape_cast %121 : vector<2x8xf32> to vector<2x8x1xf32>
    %cst_27 = arith.constant dense<0xFF800000> : vector<2x1xf32>
    %123 = vector.multi_reduction <maximumf>, %122, %cst_27 [1] : vector<2x8x1xf32> to vector<2x1xf32>
    %124 = vector.shape_cast %123 : vector<2x1xf32> to vector<2x1x1xf32>
    %125 = vector.broadcast %124 : vector<2x1x1xf32> to vector<2x8x1xf32>
    %126 = arith.subf %122, %125 : vector<2x8x1xf32>
    %127 = math.exp %126 : vector<2x8x1xf32>
    %cst_28 = arith.constant dense<0.000000e+00> : vector<2x1xf32>
    %128 = vector.multi_reduction <add>, %127, %cst_28 [1] : vector<2x8x1xf32> to vector<2x1xf32>
    %129 = vector.shape_cast %128 : vector<2x1xf32> to vector<2x1x1xf32>
    %130 = tpu.reciprocal %129 {approx = true} : vector<2x1x1xf32> -> vector<2x1x1xf32>
    %131 = vector.broadcast %130 : vector<2x1x1xf32> to vector<2x8x1xf32>
    %132 = arith.mulf %127, %131 : vector<2x8x1xf32>
    %133 = vector.broadcast %132 : vector<2x8x1xf32> to vector<2x8x128xf32>
    %134 = arith.mulf %133, %75 : vector<2x8x128xf32>
    %cst_29 = arith.constant dense<0.000000e+00> : vector<2x128xf32>
    %135 = vector.multi_reduction <add>, %134, %cst_29 [1] : vector<2x8x128xf32> to vector<2x128xf32>
    %cst_30 = arith.constant dense<0.000000e+00> : vector<2x128xf32>
    %136 = tpu.matmul %117, %76, %cst_30 {dimension_numbers = #tpu.dot_dimension_numbers<[1], [0], [0], [1], [0, 0, 1, 1], [], []>} : vector<2x128xf32>, vector<128x128xf32>, vector<2x128xf32> -> vector<2x128xf32>
    %137 = arith.addf %136, %135 : vector<2x128xf32>
    %cst_31 = arith.constant dense<0.000000e+00> : vector<2x128xf32>
    %138 = tpu.matmul %137, %77, %cst_31 {dimension_numbers = #tpu.dot_dimension_numbers<[1], [0], [0], [1], [0, 0, 1, 1], [], []>} : vector<2x128xf32>, vector<128x128xf32>, vector<2x128xf32> -> vector<2x128xf32>
    %c0_32 = arith.constant 0 : index
    %c0_33 = arith.constant 0 : index
    %139 = vector.load %arg8[%c0_32, %c0_33] : memref<2x128xf32, #tpu.memory_space<vmem>>, vector<2x128xf32>
    tpu.vector_store %arg8[%c0_32, %c0_33], %138 {strides = array<i32>} : memref<2x128xf32, #tpu.memory_space<vmem>>, vector<2x128xf32>,
    return
  }
  func.func @transform_0(%arg0: i32) -> (i32, i32) {
    %c0_i32 = arith.constant 0 : i32
    %c0_i32_0 = arith.constant 0 : i32
    %c0_i32_1 = arith.constant 0 : i32
    return %c0_i32, %c0_i32_0 : i32, i32
  }
  func.func @transform_1(%arg0: i32) -> (i32, i32) {
    %c0_i32 = arith.constant 0 : i32
    %c0_i32_0 = arith.constant 0 : i32
    %c0_i32_1 = arith.constant 0 : i32
    return %c0_i32, %c0_i32_0 : i32, i32
  }
  func.func @transform_2(%arg0: i32) -> (i32, i32) {
    %c0_i32 = arith.constant 0 : i32
    %c0_i32_0 = arith.constant 0 : i32
    %c0_i32_1 = arith.constant 0 : i32
    return %c0_i32, %c0_i32_0 : i32, i32
  }
  func.func @transform_3(%arg0: i32) -> (i32, i32) {
    %c0_i32 = arith.constant 0 : i32
    %c0_i32_0 = arith.constant 0 : i32
    %c0_i32_1 = arith.constant 0 : i32
    return %c0_i32, %c0_i32_0 : i32, i32
  }
  func.func @transform_4(%arg0: i32) -> (i32, i32) {
    %c0_i32 = arith.constant 0 : i32
    %c0_i32_0 = arith.constant 0 : i32
    %c0_i32_1 = arith.constant 0 : i32
    return %c0_i32, %c0_i32_0 : i32, i32
  }
  func.func @transform_5(%arg0: i32) -> (i32, i32) {
    %c0_i32 = arith.constant 0 : i32
    %c0_i32_0 = arith.constant 0 : i32
    %c0_i32_1 = arith.constant 0 : i32
    return %c0_i32, %c0_i32_0 : i32, i32
  }
  func.func @transform_6(%arg0: i32) -> (i32, i32) {
    %c0_i32 = arith.constant 0 : i32
    %c0_i32_0 = arith.constant 0 : i32
    %c0_i32_1 = arith.constant 0 : i32
    return %c0_i32, %c0_i32_0 : i32, i32
  }
  func.func @transform_7(%arg0: i32) -> (i32, i32) {
    %c0_i32 = arith.constant 0 : i32
    %c0_i32_0 = arith.constant 0 : i32
    %c0_i32_1 = arith.constant 0 : i32
    return %c0_i32, %c0_i32_0 : i32, i32
  }
}

</mosaic_0001>

<llo_original>
// kernel: tpu_custom_call.1
$region0: #{tpu_custom_call.1}
  #allocation0 [shape = 'u32[]', space=smem, size = 0x4, offset = 0x4, fixed_abs, tag = 'smem constant byte address 0x4 - core index']
  #allocation1 [shape = 'u32[144,128]{1,0:T(1,128)}', space=vmem, size = 0x12000, scoped, tag = 'internal scratch']
  %s0 = inlined_call_operand.vmem [shape: s32[16,6], index: 0, kind: input, shape index: {}]
  %s1 = inlined_call_operand.vmem [shape: s32[2,6], index: 1, kind: input, shape index: {}]
  %s2 = inlined_call_operand.hbm [shape: f32[128,128], index: 2, kind: input, shape index: {}]
  %s3 = inlined_call_operand.hbm [shape: f32[128,128], index: 3, kind: input, shape index: {}]
  %s4 = inlined_call_operand.hbm [shape: f32[128,128], index: 4, kind: input, shape index: {}]
  %s5 = inlined_call_operand.hbm [shape: f32[128,128], index: 5, kind: input, shape index: {}]
  %s6 = inlined_call_operand.hbm [shape: f32[128,128], index: 6, kind: input, shape index: {}]
  %s7 = inlined_call_operand.hbm [shape: f32[2,128], index: 7, kind: output, shape index: {}]
  %s8 = sld [smem:[#allocation0]]
  $region58: #{tpu_custom_call.1} parent=0
    _
  %s10 = ssub.s32 1, %s8
  %s11 = scalar_select 0, %s10, %s8
  $region1: #{tpu_custom_call.1} parent=0
    #allocation2 [shape = 'u8[65536]{0}', space=vmem, size = 0x10000, scoped, tag = 'input window, operand 2, single buffered']
    #allocation3 [shape = 's32[1]{0}', space=sflag, size = 0x4, scoped, tag = 'scoped memory for tpu_custom_call.1']
    #allocation4 [shape = 's32[1]{0}', space=sflag, size = 0x4, scoped, tag = 'scoped memory for tpu_custom_call.1']
    #allocation5 [shape = 'u8[65536]{0}', space=vmem, size = 0x10000, scoped, tag = 'input window, operand 3, single buffered']
    #allocation6 [shape = 's32[1]{0}', space=sflag, size = 0x4, scoped, tag = 'scoped memory for tpu_custom_call.1']
    #allocation7 [shape = 'u8[65536]{0}', space=vmem, size = 0x10000, scoped, tag = 'input window, operand 4, single buffered']
    #allocation8 [shape = 'u8[65536]{0}', space=vmem, size = 0x10000, scoped, tag = 'input window, operand 5, single buffered']
    #allocation9 [shape = 's32[1]{0}', space=sflag, size = 0x4, scoped, tag = 'scoped memory for tpu_custom_call.1']
    #allocation10 [shape = 'u8[65536]{0}', space=vmem, size = 0x10000, scoped, tag = 'input window, operand 6, single buffered']
    #allocation11 [shape = 'u8[1024]{0}', space=vmem, size = 0x400, scoped, tag = 'output window, operand 0, single buffered']
    %12 = vsyncpa [#allocation3], 0
    %13 = vsyncpa [#allocation6], 0
    %14 = vsyncpa [#allocation9], 0
    %15 = vsyncpa [#allocation4], 0
    // Predicated region
    $region2: #{tpu_custom_call.1} parent=1 // pred_check
      _
    $region3: #{tpu_custom_call.1} parent=1 // pred_check_branch
      %17 = sbr.rel (0) target = $region5
    $region4: #{tpu_custom_call.1} parent=1 // pred_region
      _
    $region5: #{tpu_custom_call.1} parent=1 // pred_fallthru
      _
    // Predicated region
    $region6: #{tpu_custom_call.1} parent=1 // pred_check
      _
    $region7: #{tpu_custom_call.1} parent=1 // pred_check_branch
      %19 = sbr.rel (0) target = $region9
    $region8: #{tpu_custom_call.1} parent=1 // pred_region
      _
    $region9: #{tpu_custom_call.1} parent=1 // pred_fallthru
      _
    // Predicated region
    $region10: #{tpu_custom_call.1} parent=1 // pred_check
      _
    $region11: #{tpu_custom_call.1} parent=1 // pred_check_branch
      %21 = sbr.rel (0) target = $region13
    $region12: #{tpu_custom_call.1} parent=1 // pred_region
      %s23 = ssub.s32 2048, 2048
      %24 = vsyncadd [#allocation3], %s23
      %s25 = sshll.u32 [#allocation2], 4
      %s26 = int_to_ptr.vmem [resolvable:$true] %s25
      %31 = dma.hbm_to_vmem [thread:$0]  %s2, 2048, %s26, [#allocation3], 128, 128, 8
    $region13: #{tpu_custom_call.1} parent=1 // pred_fallthru
      _
    // Predicated region
    $region14: #{tpu_custom_call.1} parent=1 // pred_check
      _
    $region15: #{tpu_custom_call.1} parent=1 // pred_check_branch
      %33 = sbr.rel (0) target = $region17
    $region16: #{tpu_custom_call.1} parent=1 // pred_region
      %s35 = ssub.s32 2048, 2048
      %36 = vsyncadd [#allocation6], %s35
      %s37 = sshll.u32 [#allocation5], 4
      %s38 = int_to_ptr.vmem [resolvable:$true] %s37
      %43 = dma.hbm_to_vmem [thread:$0]  %s3, 2048, %s38, [#allocation6], 128, 128, 8
    $region17: #{tpu_custom_call.1} parent=1 // pred_fallthru
      _
    // Predicated region
    $region18: #{tpu_custom_call.1} parent=1 // pred_check
      _
    $region19: #{tpu_custom_call.1} parent=1 // pred_check_branch
      %45 = sbr.rel (0) target = $region21
    $region20: #{tpu_custom_call.1} parent=1 // pred_region
      %s47 = ssub.s32 2048, 2048
      %48 = vsyncadd [#allocation6], %s47
      %s49 = sshll.u32 [#allocation7], 4
      %s50 = int_to_ptr.vmem [resolvable:$true] %s49
      %55 = dma.hbm_to_vmem [thread:$0]  %s4, 2048, %s50, [#allocation6], 128, 128, 8
    $region21: #{tpu_custom_call.1} parent=1 // pred_fallthru
      _
    // Predicated region
    $region22: #{tpu_custom_call.1} parent=1 // pred_check
      _
    $region23: #{tpu_custom_call.1} parent=1 // pred_check_branch
      %57 = sbr.rel (0) target = $region25
    $region24: #{tpu_custom_call.1} parent=1 // pred_region
      %s59 = ssub.s32 2048, 2048
      %60 = vsyncadd [#allocation9], %s59
      %s61 = sshll.u32 [#allocation8], 4
      %s62 = int_to_ptr.vmem [resolvable:$true] %s61
      %67 = dma.hbm_to_vmem [thread:$0]  %s5, 2048, %s62, [#allocation9], 128, 128, 8
    $region25: #{tpu_custom_call.1} parent=1 // pred_fallthru
      _
    // Predicated region
    $region26: #{tpu_custom_call.1} parent=1 // pred_check
      _
    $region27: #{tpu_custom_call.1} parent=1 // pred_check_branch
      %69 = sbr.rel (0) target = $region29
    $region28: #{tpu_custom_call.1} parent=1 // pred_region
      %s71 = ssub.s32 2048, 2048
      %72 = vsyncadd [#allocation9], %s71
      %s73 = sshll.u32 [#allocation10], 4
      %s74 = int_to_ptr.vmem [resolvable:$true] %s73
      %79 = dma.hbm_to_vmem [thread:$0]  %s6, 2048, %s74, [#allocation9], 128, 128, 8
    $region29: #{tpu_custom_call.1} parent=1 // pred_fallthru
      _
    // Predicated region
    $region30: #{tpu_custom_call.1} parent=1 // pred_check
      _
    $region31: #{tpu_custom_call.1} parent=1 // pred_check_branch
      %81 = sbr.rel (0) target = $region33
    $region32: #{tpu_custom_call.1} parent=1 // pred_region
      %82 = dma.done [#allocation3], 2048
    $region33: #{tpu_custom_call.1} parent=1 // pred_fallthru
      _
    // Predicated region
    $region34: #{tpu_custom_call.1} parent=1 // pred_check
      _
    $region35: #{tpu_custom_call.1} parent=1 // pred_check_branch
      %84 = sbr.rel (0) target = $region37
    $region36: #{tpu_custom_call.1} parent=1 // pred_region
      %85 = dma.done [#allocation6], 2048
    $region37: #{tpu_custom_call.1} parent=1 // pred_fallthru
      _
    // Predicated region
    $region38: #{tpu_custom_call.1} parent=1 // pred_check
      _
    $region39: #{tpu_custom_call.1} parent=1 // pred_check_branch
      %87 = sbr.rel (0) target = $region41
    $region40: #{tpu_custom_call.1} parent=1 // pred_region
      %88 = dma.done [#allocation6], 2048
    $region41: #{tpu_custom_call.1} parent=1 // pred_fallthru
      _
    // Predicated region
    $region42: #{tpu_custom_call.1} parent=1 // pred_check
      _
    $region43: #{tpu_custom_call.1} parent=1 // pred_check_branch
      %90 = sbr.rel (0) target = $region45
    $region44: #{tpu_custom_call.1} parent=1 // pred_region
      %91 = dma.done [#allocation9], 2048
    $region45: #{tpu_custom_call.1} parent=1 // pred_fallthru
      _
    // Predicated region
    $region46: #{tpu_custom_call.1} parent=1 // pred_check
      _
    $region47: #{tpu_custom_call.1} parent=1 // pred_check_branch
      %93 = sbr.rel (0) target = $region49
    $region48: #{tpu_custom_call.1} parent=1 // pred_region
      %94 = dma.done [#allocation9], 2048
    $region49: #{tpu_custom_call.1} parent=1 // pred_fallthru
      _
    %v95 = vld [vmem:[%s0] sm:$0xff]
    %v96 = vld [vmem:[%s0 + $0x8] sm:$0xff]
    %v97 = vld [vmem:[%s1] sm:$0x3]
    %v98 = vlaneseq
    %v99 = vand.u32 %v98, 127
    %100 = vset.pattern.permute.xlu0 0
    %101 = vperm.xlu0 %100, %v95
    %v102 = vpop.permute.xlu0 %101
    %103 = vset.pattern.permute.xlu0 0
    %104 = vperm.xlu0 %103, %v96
    %v105 = vpop.permute.xlu0 %104
    %vm106 = vcmp.eq.s32.totalorder %v102, %v99
    %vm107 = vcmp.eq.s32.totalorder %v105, %v99
    %v108 = vsel %vm106, 1, 0
    %v109 = vsel %vm107, 1, 0
    %110 = vset.pattern.permute.xlu0 0
    %111 = vperm.xlu0 %110, %v97
    %v112 = vpop.permute.xlu0 %111
    %vm113 = vcmp.eq.s32.totalorder %v112, %v99
    %v114 = vsel %vm113, 1, 0
    %115 = vset.pattern.permute.xlu0 1
    %116 = vperm.xlu0 %115, %v95
    %v117 = vpop.permute.xlu0 %116
    %118 = vset.pattern.permute.xlu0 1
    %119 = vperm.xlu0 %118, %v96
    %v120 = vpop.permute.xlu0 %119
    %vm121 = vcmp.eq.s32.totalorder %v117, %v99
    %vm122 = vcmp.eq.s32.totalorder %v120, %v99
    %v123 = vsel %vm121, 1, 0
    %v124 = vsel %vm122, 1, 0
    %v125 = vadd.s32 %v108, %v123
    %v126 = vadd.s32 %v109, %v124
    %127 = vset.pattern.permute.xlu0 1
    %128 = vperm.xlu0 %127, %v97
    %v129 = vpop.permute.xlu0 %128
    %vm130 = vcmp.eq.s32.totalorder %v129, %v99
    %v131 = vsel %vm130, 1, 0
    %v132 = vadd.s32 %v114, %v131
    %133 = vset.pattern.permute.xlu0 2
    %134 = vperm.xlu0 %133, %v95
    %v135 = vpop.permute.xlu0 %134
    %136 = vset.pattern.permute.xlu0 2
    %137 = vperm.xlu0 %136, %v96
    %v138 = vpop.permute.xlu0 %137
    %vm139 = vcmp.eq.s32.totalorder %v135, %v99
    %vm140 = vcmp.eq.s32.totalorder %v138, %v99
    %v141 = vsel %vm139, 1, 0
    %v142 = vsel %vm140, 1, 0
    %v143 = vadd.s32 %v125, %v141
    %v144 = vadd.s32 %v126, %v142
    %145 = vset.pattern.permute.xlu0 2
    %146 = vperm.xlu0 %145, %v97
    %v147 = vpop.permute.xlu0 %146
    %vm148 = vcmp.eq.s32.totalorder %v147, %v99
    %v149 = vsel %vm148, 1, 0
    %v150 = vadd.s32 %v132, %v149
    %151 = vset.pattern.permute.xlu0 3
    %152 = vperm.xlu0 %151, %v95
    %v153 = vpop.permute.xlu0 %152
    %154 = vset.pattern.permute.xlu0 3
    %155 = vperm.xlu0 %154, %v96
    %v156 = vpop.permute.xlu0 %155
    %vm157 = vcmp.eq.s32.totalorder %v153, %v99
    %vm158 = vcmp.eq.s32.totalorder %v156, %v99
    %v159 = vsel %vm157, 1, 0
    %v160 = vsel %vm158, 1, 0
    %v161 = vadd.s32 %v143, %v159
    %v162 = vadd.s32 %v144, %v160
    %163 = vset.pattern.permute.xlu0 3
    %164 = vperm.xlu0 %163, %v97
    %v165 = vpop.permute.xlu0 %164
    %vm166 = vcmp.eq.s32.totalorder %v165, %v99
    %v167 = vsel %vm166, 1, 0
    %v168 = vadd.s32 %v150, %v167
    %169 = vset.pattern.permute.xlu0 4
    %170 = vperm.xlu0 %169, %v95
    %v171 = vpop.permute.xlu0 %170
    %172 = vset.pattern.permute.xlu0 4
    %173 = vperm.xlu0 %172, %v96
    %v174 = vpop.permute.xlu0 %173
    %vm175 = vcmp.eq.s32.totalorder %v171, %v99
    %vm176 = vcmp.eq.s32.totalorder %v174, %v99
    %v177 = vsel %vm175, 1, 0
    %v178 = vsel %vm176, 1, 0
    %v179 = vadd.s32 %v161, %v177
    %v180 = vadd.s32 %v162, %v178
    %181 = vset.pattern.permute.xlu0 4
    %182 = vperm.xlu0 %181, %v97
    %v183 = vpop.permute.xlu0 %182
    %vm184 = vcmp.eq.s32.totalorder %v183, %v99
    %v185 = vsel %vm184, 1, 0
    %v186 = vadd.s32 %v168, %v185
    %187 = vset.pattern.permute.xlu0 5
    %188 = vperm.xlu0 %187, %v95
    %v189 = vpop.permute.xlu0 %188
    %190 = vset.pattern.permute.xlu0 5
    %191 = vperm.xlu0 %190, %v96
    %v192 = vpop.permute.xlu0 %191
    %vm193 = vcmp.eq.s32.totalorder %v189, %v99
    %vm194 = vcmp.eq.s32.totalorder %v192, %v99
    %v195 = vsel %vm193, 1, 0
    %v196 = vsel %vm194, 1, 0
    %v197 = vadd.s32 %v179, %v195
    %v198 = vadd.s32 %v180, %v196
    %199 = vset.pattern.permute.xlu0 5
    %200 = vperm.xlu0 %199, %v97
    %v201 = vpop.permute.xlu0 %200
    %vm202 = vcmp.eq.s32.totalorder %v201, %v99
    %v203 = vsel %vm202, 1, 0
    %v204 = vadd.s32 %v186, %v203
    %v205 = vcvt.s32.f32 %v197
    %v206 = vcvt.s32.f32 %v198
    %v207 = vcvt.s32.f32 %v204
    %v208 = vld [vmem:[#allocation2] sm:$0xff]
    %v209 = vld [vmem:[#allocation2 + $0x8] sm:$0xff]
    %v210 = vld [vmem:[#allocation2 + $0x10] sm:$0xff]
    %v211 = vld [vmem:[#allocation2 + $0x18] sm:$0xff]
    %v212 = vld [vmem:[#allocation2 + $0x20] sm:$0xff]
    %v213 = vld [vmem:[#allocation2 + $0x28] sm:$0xff]
    %v214 = vld [vmem:[#allocation2 + $0x30] sm:$0xff]
    %v215 = vld [vmem:[#allocation2 + $0x38] sm:$0xff]
    %v216 = vld [vmem:[#allocation2 + $0x40] sm:$0xff]
    %v217 = vld [vmem:[#allocation2 + $0x48] sm:$0xff]
    %v218 = vld [vmem:[#allocation2 + $0x50] sm:$0xff]
    %v219 = vld [vmem:[#allocation2 + $0x58] sm:$0xff]
    %v220 = vld [vmem:[#allocation2 + $0x60] sm:$0xff]
    %v221 = vld [vmem:[#allocation2 + $0x68] sm:$0xff]
    %v222 = vld [vmem:[#allocation2 + $0x70] sm:$0xff]
    %v223 = vld [vmem:[#allocation2 + $0x78] sm:$0xff]
    %v224 = vld [vmem:[#allocation5] sm:$0xff]
    %v225 = vld [vmem:[#allocation5 + $0x8] sm:$0xff]
    %v226 = vld [vmem:[#allocation5 + $0x10] sm:$0xff]
    %v227 = vld [vmem:[#allocation5 + $0x18] sm:$0xff]
    %v228 = vld [vmem:[#allocation5 + $0x20] sm:$0xff]
    %v229 = vld [vmem:[#allocation5 + $0x28] sm:$0xff]
    %v230 = vld [vmem:[#allocation5 + $0x30] sm:$0xff]
    %v231 = vld [vmem:[#allocation5 + $0x38] sm:$0xff]
    %v232 = vld [vmem:[#allocation5 + $0x40] sm:$0xff]
    %v233 = vld [vmem:[#allocation5 + $0x48] sm:$0xff]
    %v234 = vld [vmem:[#allocation5 + $0x50] sm:$0xff]
    %v235 = vld [vmem:[#allocation5 + $0x58] sm:$0xff]
    %v236 = vld [vmem:[#allocation5 + $0x60] sm:$0xff]
    %v237 = vld [vmem:[#allocation5 + $0x68] sm:$0xff]
    %v238 = vld [vmem:[#allocation5 + $0x70] sm:$0xff]
    %v239 = vld [vmem:[#allocation5 + $0x78] sm:$0xff]
    %v240 = vld [vmem:[#allocation7] sm:$0xff]
    %v241 = vld [vmem:[#allocation7 + $0x8] sm:$0xff]
    %v242 = vld [vmem:[#allocation7 + $0x10] sm:$0xff]
    %v243 = vld [vmem:[#allocation7 + $0x18] sm:$0xff]
    %v244 = vld [vmem:[#allocation7 + $0x20] sm:$0xff]
    %v245 = vld [vmem:[#allocation7 + $0x28] sm:$0xff]
    %v246 = vld [vmem:[#allocation7 + $0x30] sm:$0xff]
    %v247 = vld [vmem:[#allocation7 + $0x38] sm:$0xff]
    %v248 = vld [vmem:[#allocation7 + $0x40] sm:$0xff]
    %v249 = vld [vmem:[#allocation7 + $0x48] sm:$0xff]
    %v250 = vld [vmem:[#allocation7 + $0x50] sm:$0xff]
    %v251 = vld [vmem:[#allocation7 + $0x58] sm:$0xff]
    %v252 = vld [vmem:[#allocation7 + $0x60] sm:$0xff]
    %v253 = vld [vmem:[#allocation7 + $0x68] sm:$0xff]
    %v254 = vld [vmem:[#allocation7 + $0x70] sm:$0xff]
    %v255 = vld [vmem:[#allocation7 + $0x78] sm:$0xff]
    %256 = vmatprep.subr.mxu0 0.0
    %257 = vmatpush1.msra.mxu0 %v208
    %258 = vmatprep.subr.mxu0 0.0
    %259 = vmatpush1.msra.mxu0 %v209
    %260 = vmatprep.subr.mxu0 0.0
    %261 = vmatpush1.msra.mxu0 %v210
    %262 = vmatprep.subr.mxu0 0.0
    %263 = vmatpush1.msra.mxu0 %v211
    %264 = vmatprep.subr.mxu0 0.0
    %265 = vmatpush1.msra.mxu0 %v212
    %266 = vmatprep.subr.mxu0 0.0
    %267 = vmatpush1.msra.mxu0 %v213
    %268 = vmatprep.subr.mxu0 0.0
    %269 = vmatpush1.msra.mxu0 %v214
    %270 = vmatprep.subr.mxu0 0.0
    %271 = vmatpush1.msra.mxu0 %v215
    %272 = vmatprep.subr.mxu0 0.0
    %273 = vmatpush1.msra.mxu0 %v216
    %274 = vmatprep.subr.mxu0 0.0
    %275 = vmatpush1.msra.mxu0 %v217
    %276 = vmatprep.subr.mxu0 0.0
    %277 = vmatpush1.msra.mxu0 %v218
    %278 = vmatprep.subr.mxu0 0.0
    %279 = vmatpush1.msra.mxu0 %v219
    %280 = vmatprep.subr.mxu0 0.0
    %281 = vmatpush1.msra.mxu0 %v220
    %282 = vmatprep.subr.mxu0 0.0
    %283 = vmatpush1.msra.mxu0 %v221
    %284 = vmatprep.subr.mxu0 0.0
    %285 = vmatpush1.msra.mxu0 %v222
    %286 = vmatprep.subr.mxu0 0.0
    %287 = vmatpush1.msra.mxu0 %v223
    %288 = vmatprep.subr.mxu0 0.0
    %289 = vmatpush1.msra.mxu0 0.0
    %290 = vmatprep.subr.mxu0 0.0
    %291 = vmatpush1.msra.mxu0 0.0
    %292 = vmatprep.subr.mxu0 0.0
    %293 = vmatpush1.msra.mxu0 0.0
    %294 = vmatprep.subr.mxu0 0.0
    %295 = vmatpush1.msra.mxu0 0.0
    %296 = vmatprep.subr.mxu0 0.0
    %297 = vmatpush1.msra.mxu0 0.0
    %298 = vmatprep.subr.mxu0 0.0
    %299 = vmatpush1.msra.mxu0 0.0
    %300 = vmatprep.subr.mxu0 0.0
    %301 = vmatpush1.msra.mxu0 0.0
    %302 = vmatprep.subr.mxu0 0.0
    %303 = vmatpush1.msra.mxu0 0.0
    %304 = vmatprep.subr.mxu0 0.0
    %305 = vmatpush1.msra.mxu0 0.0
    %306 = vmatprep.subr.mxu0 0.0
    %307 = vmatpush1.msra.mxu0 0.0
    %308 = vmatprep.subr.mxu0 0.0
    %309 = vmatpush1.msra.mxu0 0.0
    %310 = vmatprep.subr.mxu0 0.0
    %311 = vmatpush1.msra.mxu0 0.0
    %312 = vmatprep.subr.mxu0 0.0
    %313 = vmatpush1.msra.mxu0 0.0
    %314 = vmatprep.subr.mxu0 0.0
    %315 = vmatpush1.msra.mxu0 0.0
    %316 = vmatprep.subr.mxu0 0.0
    %317 = vmatpush1.msra.mxu0 0.0
    %318 = vmatprep.subr.mxu0 0.0
    %319 = vmatpush1.msra.mxu0 0.0
    %320 = vmatprep.mubr.f32.mxu0 0.0
    %321 = vmatmul.mubr.f32.gmra.mrb[0].mxu0 %v205
    %v322 = vpop.f32.mrb[0].mxu0
    %v323 = vadd.f32 0.0, %v322
    %v324 = vpop.f32.mrb[0].mxu0
    %325 = vmatprep.mubr.f32.mxu0 0.0
    %326 = vmatmul.mubr.f32.gmra.mrb[0].mxu0 %v206
    %v327 = vpop.f32.mrb[0].mxu0
    %v328 = vadd.f32 0.0, %v327
    %v329 = vpop.f32.mrb[0].mxu0
    %330 = vdwg.mxu0
    %331 = vmatprep.subr.mxu0 0.0
    %332 = vmatpush1.msra.mxu0 %v240
    %333 = vmatprep.subr.mxu0 0.0
    %334 = vmatpush1.msra.mxu0 %v241
    %335 = vmatprep.subr.mxu0 0.0
    %336 = vmatpush1.msra.mxu0 %v242
    %337 = vmatprep.subr.mxu0 0.0
    %338 = vmatpush1.msra.mxu0 %v243
    %339 = vmatprep.subr.mxu0 0.0
    %340 = vmatpush1.msra.mxu0 %v244
    %341 = vmatprep.subr.mxu0 0.0
    %342 = vmatpush1.msra.mxu0 %v245
    %343 = vmatprep.subr.mxu0 0.0
    %344 = vmatpush1.msra.mxu0 %v246
    %345 = vmatprep.subr.mxu0 0.0
    %346 = vmatpush1.msra.mxu0 %v247
    %347 = vmatprep.subr.mxu0 0.0
    %348 = vmatpush1.msra.mxu0 %v248
    %349 = vmatprep.subr.mxu0 0.0
    %350 = vmatpush1.msra.mxu0 %v249
    %351 = vmatprep.subr.mxu0 0.0
    %352 = vmatpush1.msra.mxu0 %v250
    %353 = vmatprep.subr.mxu0 0.0
    %354 = vmatpush1.msra.mxu0 %v251
    %355 = vmatprep.subr.mxu0 0.0
    %356 = vmatpush1.msra.mxu0 %v252
    %357 = vmatprep.subr.mxu0 0.0
    %358 = vmatpush1.msra.mxu0 %v253
    %359 = vmatprep.subr.mxu0 0.0
    %360 = vmatpush1.msra.mxu0 %v254
    %361 = vmatprep.subr.mxu0 0.0
    %362 = vmatpush1.msra.mxu0 %v255
    %363 = vmatprep.subr.mxu0 0.0
    %364 = vmatpush1.msra.mxu0 0.0
    %365 = vmatprep.subr.mxu0 0.0
    %366 = vmatpush1.msra.mxu0 0.0
    %367 = vmatprep.subr.mxu0 0.0
    %368 = vmatpush1.msra.mxu0 0.0
    %369 = vmatprep.subr.mxu0 0.0
    %370 = vmatpush1.msra.mxu0 0.0
    %371 = vmatprep.subr.mxu0 0.0
    %372 = vmatpush1.msra.mxu0 0.0
    %373 = vmatprep.subr.mxu0 0.0
    %374 = vmatpush1.msra.mxu0 0.0
    %375 = vmatprep.subr.mxu0 0.0
    %376 = vmatpush1.msra.mxu0 0.0
    %377 = vmatprep.subr.mxu0 0.0
    %378 = vmatpush1.msra.mxu0 0.0
    %379 = vmatprep.subr.mxu0 0.0
    %380 = vmatpush1.msra.mxu0 0.0
    %381 = vmatprep.subr.mxu0 0.0
    %382 = vmatpush1.msra.mxu0 0.0
    %383 = vmatprep.subr.mxu0 0.0
    %384 = vmatpush1.msra.mxu0 0.0
    %385 = vmatprep.subr.mxu0 0.0
    %386 = vmatpush1.msra.mxu0 0.0
    %387 = vmatprep.subr.mxu0 0.0
    %388 = vmatpush1.msra.mxu0 0.0
    %389 = vmatprep.subr.mxu0 0.0
    %390 = vmatpush1.msra.mxu0 0.0
    %391 = vmatprep.subr.mxu0 0.0
    %392 = vmatpush1.msra.mxu0 0.0
    %393 = vmatprep.subr.mxu0 0.0
    %394 = vmatpush1.msra.mxu0 0.0
    %395 = vmatprep.mubr.f32.mxu0 0.0
    %396 = vmatmul.mubr.f32.gmra.mrb[0].mxu0 %v205
    %v397 = vpop.f32.mrb[0].mxu0
    %v398 = vadd.f32 0.0, %v397
    %v399 = vpop.f32.mrb[0].mxu0
    %400 = vmatprep.mubr.f32.mxu0 0.0
    %401 = vmatmul.mubr.f32.gmra.mrb[0].mxu0 %v206
    %v402 = vpop.f32.mrb[0].mxu0
    %v403 = vadd.f32 0.0, %v402
    %v404 = vpop.f32.mrb[0].mxu0
    %405 = vdwg.mxu0
    %406 = vmatprep.subr.mxu0 0.0
    %407 = vmatpush1.msra.mxu0 %v224
    %408 = vmatprep.subr.mxu0 0.0
    %409 = vmatpush1.msra.mxu0 %v225
    %410 = vmatprep.subr.mxu0 0.0
    %411 = vmatpush1.msra.mxu0 %v226
    %412 = vmatprep.subr.mxu0 0.0
    %413 = vmatpush1.msra.mxu0 %v227
    %414 = vmatprep.subr.mxu0 0.0
    %415 = vmatpush1.msra.mxu0 %v228
    %416 = vmatprep.subr.mxu0 0.0
    %417 = vmatpush1.msra.mxu0 %v229
    %418 = vmatprep.subr.mxu0 0.0
    %419 = vmatpush1.msra.mxu0 %v230
    %420 = vmatprep.subr.mxu0 0.0
    %421 = vmatpush1.msra.mxu0 %v231
    %422 = vmatprep.subr.mxu0 0.0
    %423 = vmatpush1.msra.mxu0 %v232
    %424 = vmatprep.subr.mxu0 0.0
    %425 = vmatpush1.msra.mxu0 %v233
    %426 = vmatprep.subr.mxu0 0.0
    %427 = vmatpush1.msra.mxu0 %v234
    %428 = vmatprep.subr.mxu0 0.0
    %429 = vmatpush1.msra.mxu0 %v235
    %430 = vmatprep.subr.mxu0 0.0
    %431 = vmatpush1.msra.mxu0 %v236
    %432 = vmatprep.subr.mxu0 0.0
    %433 = vmatpush1.msra.mxu0 %v237
    %434 = vmatprep.subr.mxu0 0.0
    %435 = vmatpush1.msra.mxu0 %v238
    %436 = vmatprep.subr.mxu0 0.0
    %437 = vmatpush1.msra.mxu0 %v239
    %438 = vmatprep.subr.mxu0 0.0
    %439 = vmatpush1.msra.mxu0 0.0
    %440 = vmatprep.subr.mxu0 0.0
    %441 = vmatpush1.msra.mxu0 0.0
    %442 = vmatprep.subr.mxu0 0.0
    %443 = vmatpush1.msra.mxu0 0.0
    %444 = vmatprep.subr.mxu0 0.0
    %445 = vmatpush1.msra.mxu0 0.0
    %446 = vmatprep.subr.mxu0 0.0
    %447 = vmatpush1.msra.mxu0 0.0
    %448 = vmatprep.subr.mxu0 0.0
    %449 = vmatpush1.msra.mxu0 0.0
    %450 = vmatprep.subr.mxu0 0.0
    %451 = vmatpush1.msra.mxu0 0.0
    %452 = vmatprep.subr.mxu0 0.0
    %453 = vmatpush1.msra.mxu0 0.0
    %454 = vmatprep.subr.mxu0 0.0
    %455 = vmatpush1.msra.mxu0 0.0
    %456 = vmatprep.subr.mxu0 0.0
    %457 = vmatpush1.msra.mxu0 0.0
    %458 = vmatprep.subr.mxu0 0.0
    %459 = vmatpush1.msra.mxu0 0.0
    %460 = vmatprep.subr.mxu0 0.0
    %461 = vmatpush1.msra.mxu0 0.0
    %462 = vmatprep.subr.mxu0 0.0
    %463 = vmatpush1.msra.mxu0 0.0
    %464 = vmatprep.subr.mxu0 0.0
    %465 = vmatpush1.msra.mxu0 0.0
    %466 = vmatprep.subr.mxu0 0.0
    %467 = vmatpush1.msra.mxu0 0.0
    %468 = vmatprep.subr.mxu0 0.0
    %469 = vmatpush1.msra.mxu0 0.0
    %470 = vmatprep.mubr.f32.mxu0 0.0
    %471 = vmatmul.mubr.f32.gmra.mrb[0].mxu0 %v207
    %v472 = vpop.f32.mrb[0].mxu0
    %v473 = vadd.f32 0.0, %v472
    %v474 = vpop.f32.mrb[0].mxu0
    %475 = vdwg.mxu0
    %v476 = vld [vmem:[#allocation8] sm:$0xff]
    %v477 = vld [vmem:[#allocation8 + $0x8] sm:$0xff]
    %v478 = vld [vmem:[#allocation8 + $0x10] sm:$0xff]
    %v479 = vld [vmem:[#allocation8 + $0x18] sm:$0xff]
    %v480 = vld [vmem:[#allocation8 + $0x20] sm:$0xff]
    %v481 = vld [vmem:[#allocation8 + $0x28] sm:$0xff]
    %v482 = vld [vmem:[#allocation8 + $0x30] sm:$0xff]
    %v483 = vld [vmem:[#allocation8 + $0x38] sm:$0xff]
    %v484 = vld [vmem:[#allocation8 + $0x40] sm:$0xff]
    %v485 = vld [vmem:[#allocation8 + $0x48] sm:$0xff]
    %v486 = vld [vmem:[#allocation8 + $0x50] sm:$0xff]
    %v487 = vld [vmem:[#allocation8 + $0x58] sm:$0xff]
    %v488 = vld [vmem:[#allocation8 + $0x60] sm:$0xff]
    %v489 = vld [vmem:[#allocation8 + $0x68] sm:$0xff]
    %v490 = vld [vmem:[#allocation8 + $0x70] sm:$0xff]
    %v491 = vld [vmem:[#allocation8 + $0x78] sm:$0xff]
    %v492 = vld [vmem:[#allocation10] sm:$0xff]
    %v493 = vld [vmem:[#allocation10 + $0x8] sm:$0xff]
    %v494 = vld [vmem:[#allocation10 + $0x10] sm:$0xff]
    %v495 = vld [vmem:[#allocation10 + $0x18] sm:$0xff]
    %v496 = vld [vmem:[#allocation10 + $0x20] sm:$0xff]
    %v497 = vld [vmem:[#allocation10 + $0x28] sm:$0xff]
    %v498 = vld [vmem:[#allocation10 + $0x30] sm:$0xff]
    %v499 = vld [vmem:[#allocation10 + $0x38] sm:$0xff]
    %v500 = vld [vmem:[#allocation10 + $0x40] sm:$0xff]
    %v501 = vld [vmem:[#allocation10 + $0x48] sm:$0xff]
    %v502 = vld [vmem:[#allocation10 + $0x50] sm:$0xff]
    %v503 = vld [vmem:[#allocation10 + $0x58] sm:$0xff]
    %v504 = vld [vmem:[#allocation10 + $0x60] sm:$0xff]
    %v505 = vld [vmem:[#allocation10 + $0x68] sm:$0xff]
    %v506 = vld [vmem:[#allocation10 + $0x70] sm:$0xff]
    %v507 = vld [vmem:[#allocation10 + $0x78] sm:$0xff]
    %v510 = vunpack.c.l.s4 1966171168
    %v511 = vunpack.c.0.s8 %v510
    %v512 = vlaneseq
    %v513 = vshrl.u32 %v512, 7
    %v514 = vsub.s32 %v511, %v513
    %v515 = vrot.slane %v473, %v514
    %v516 = vcombine.high %v515, %v515
    %v518 = vunpack.c.l.s4 1966171168
    %v519 = vunpack.c.0.s8 %v518
    %v520 = vlaneseq
    %v521 = vshrl.u32 %v520, 7
    %v522 = vsub.s32 %v519, %v521
    %v523 = vrot.slane %v515, %v522
    %v525 = vunpack.c.l.s4 1966171168
    %v526 = vunpack.c.0.s8 %v525
    %v527 = vlaneseq
    %v528 = vshrl.u32 %v527, 7
    %v529 = vsub.s32 %v526, %v528
    %v530 = vrot.slane %v516, %v529
    %v531 = vlaneseq
    %v532 = vshrl.u32 %v531, 7
    %v533 = vsub.s32 0, %v532
    %v534 = vrot.slane %v523, %v533
    %v535 = vlaneseq
    %v536 = vshrl.u32 %v535, 7
    %v537 = vsub.s32 0, %v536
    %v538 = vrot.slane %v530, %v537
    %v541 = vmul.f32 %v534, %v323
    %v542 = vmul.f32 %v538, %v328
    %543 = vadd.xlane.f32.xlu0 %v541
    %v544 = vpop.xlane.xlu0 %543
    %545 = vadd.xlane.f32.xlu0 %v542
    %v546 = vpop.xlane.xlu0 %545
    %v547 = vrot.slane %v544, 4
    %v548 = vmax.f32 %v544, %v547
    %v549 = vrot.slane %v548, 2
    %v550 = vmax.f32 %v548, %v549
    %v551 = vrot.slane %v550, 1
    %v552 = vmax.f32 %v550, %v551
    %v553 = vrot.slane %v546, 4
    %v554 = vmax.f32 %v546, %v553
    %v555 = vrot.slane %v554, 2
    %v556 = vmax.f32 %v554, %v555
    %v557 = vrot.slane %v556, 1
    %v558 = vmax.f32 %v556, %v557
    %v559 = vsub.f32 %v544, %v552
    %v560 = vsub.f32 %v546, %v558
    %v561 = vmul.f32 %v559, 1.442695
    %v562 = vpow.pop %v561
    %v563 = vmul.f32 %v560, 1.442695
    %v564 = vpow.pop %v563
    %v565 = vrot.slane %v562, 4
    %v566 = vadd.f32 %v562, %v565
    %v567 = vrot.slane %v566, 2
    %v568 = vadd.f32 %v566, %v567
    %v569 = vrot.slane %v568, 1
    %v570 = vadd.f32 %v568, %v569
    %v571 = vrot.slane %v564, 4
    %v572 = vadd.f32 %v564, %v571
    %v573 = vrot.slane %v572, 2
    %v574 = vadd.f32 %v572, %v573
    %v575 = vrot.slane %v574, 1
    %v576 = vadd.f32 %v574, %v575
    %v577 = vrcp.pop %v570
    %v578 = vrcp.pop %v576
    %v579 = vmul.f32 %v562, %v577
    %v580 = vmul.f32 %v564, %v578
    %v581 = vmul.f32 %v579, %v398
    %v582 = vmul.f32 %v580, %v403
    %v583 = vrot.slane %v581, 4
    %v584 = vadd.f32 %v581, %v583
    %v585 = vrot.slane %v584, 2
    %v586 = vadd.f32 %v584, %v585
    %v587 = vrot.slane %v586, 1
    %v588 = vadd.f32 %v586, %v587
    %v589 = vrot.slane %v582, 4
    %v590 = vadd.f32 %v582, %v589
    %v591 = vrot.slane %v590, 2
    %v592 = vadd.f32 %v590, %v591
    %v593 = vrot.slane %v592, 1
    %v594 = vadd.f32 %v592, %v593
    %vm597 = vcmask 1041409
    %v598 = vsel %vm597, %v594, %v588
    %600 = vmatprep.subr.mxu0 0.0
    %601 = vmatpush1.msra.mxu0 %v476
    %602 = vmatprep.subr.mxu0 0.0
    %603 = vmatpush1.msra.mxu0 %v477
    %604 = vmatprep.subr.mxu0 0.0
    %605 = vmatpush1.msra.mxu0 %v478
    %606 = vmatprep.subr.mxu0 0.0
    %607 = vmatpush1.msra.mxu0 %v479
    %608 = vmatprep.subr.mxu0 0.0
    %609 = vmatpush1.msra.mxu0 %v480
    %610 = vmatprep.subr.mxu0 0.0
    %611 = vmatpush1.msra.mxu0 %v481
    %612 = vmatprep.subr.mxu0 0.0
    %613 = vmatpush1.msra.mxu0 %v482
    %614 = vmatprep.subr.mxu0 0.0
    %615 = vmatpush1.msra.mxu0 %v483
    %616 = vmatprep.subr.mxu0 0.0
    %617 = vmatpush1.msra.mxu0 %v484
    %618 = vmatprep.subr.mxu0 0.0
    %619 = vmatpush1.msra.mxu0 %v485
    %620 = vmatprep.subr.mxu0 0.0
    %621 = vmatpush1.msra.mxu0 %v486
    %622 = vmatprep.subr.mxu0 0.0
    %623 = vmatpush1.msra.mxu0 %v487
    %624 = vmatprep.subr.mxu0 0.0
    %625 = vmatpush1.msra.mxu0 %v488
    %626 = vmatprep.subr.mxu0 0.0
    %627 = vmatpush1.msra.mxu0 %v489
    %628 = vmatprep.subr.mxu0 0.0
    %629 = vmatpush1.msra.mxu0 %v490
    %630 = vmatprep.subr.mxu0 0.0
    %631 = vmatpush1.msra.mxu0 %v491
    %632 = vmatprep.subr.mxu0 0.0
    %633 = vmatpush1.msra.mxu0 0.0
    %634 = vmatprep.subr.mxu0 0.0
    %635 = vmatpush1.msra.mxu0 0.0
    %636 = vmatprep.subr.mxu0 0.0
    %637 = vmatpush1.msra.mxu0 0.0
    %638 = vmatprep.subr.mxu0 0.0
    %639 = vmatpush1.msra.mxu0 0.0
    %640 = vmatprep.subr.mxu0 0.0
    %641 = vmatpush1.msra.mxu0 0.0
    %642 = vmatprep.subr.mxu0 0.0
    %643 = vmatpush1.msra.mxu0 0.0
    %644 = vmatprep.subr.mxu0 0.0
    %645 = vmatpush1.msra.mxu0 0.0
    %646 = vmatprep.subr.mxu0 0.0
    %647 = vmatpush1.msra.mxu0 0.0
    %648 = vmatprep.subr.mxu0 0.0
    %649 = vmatpush1.msra.mxu0 0.0
    %650 = vmatprep.subr.mxu0 0.0
    %651 = vmatpush1.msra.mxu0 0.0
    %652 = vmatprep.subr.mxu0 0.0
    %653 = vmatpush1.msra.mxu0 0.0
    %654 = vmatprep.subr.mxu0 0.0
    %655 = vmatpush1.msra.mxu0 0.0
    %656 = vmatprep.subr.mxu0 0.0
    %657 = vmatpush1.msra.mxu0 0.0
    %658 = vmatprep.subr.mxu0 0.0
    %659 = vmatpush1.msra.mxu0 0.0
    %660 = vmatprep.subr.mxu0 0.0
    %661 = vmatpush1.msra.mxu0 0.0
    %662 = vmatprep.subr.mxu0 0.0
    %663 = vmatpush1.msra.mxu0 0.0
    %664 = vmatprep.mubr.f32.mxu0 0.0
    %665 = vmatmul.mubr.f32.gmra.mrb[0].mxu0 %v473
    %v666 = vpop.f32.mrb[0].mxu0
    %v667 = vadd.f32 %v598, %v666
    %v668 = vpop.f32.mrb[0].mxu0
    %669 = vdwg.mxu0
    %v672 = vunpack.c.l.s4 1966171168
    %v673 = vunpack.c.0.s8 %v672
    %v674 = vlaneseq
    %v675 = vshrl.u32 %v674, 7
    %v676 = vsub.s32 %v673, %v675
    %v677 = vrot.slane %v667, %v676
    %v678 = vcombine.high %v677, %v677
    %v680 = vunpack.c.l.s4 1966171168
    %v681 = vunpack.c.0.s8 %v680
    %v682 = vlaneseq
    %v683 = vshrl.u32 %v682, 7
    %v684 = vsub.s32 %v681, %v683
    %v685 = vrot.slane %v677, %v684
    %v687 = vunpack.c.l.s4 1966171168
    %v688 = vunpack.c.0.s8 %v687
    %v689 = vlaneseq
    %v690 = vshrl.u32 %v689, 7
    %v691 = vsub.s32 %v688, %v690
    %v692 = vrot.slane %v678, %v691
    %v693 = vlaneseq
    %v694 = vshrl.u32 %v693, 7
    %v695 = vsub.s32 0, %v694
    %v696 = vrot.slane %v685, %v695
    %v697 = vlaneseq
    %v698 = vshrl.u32 %v697, 7
    %v699 = vsub.s32 0, %v698
    %v700 = vrot.slane %v692, %v699
    %v703 = vmul.f32 %v696, %v323
    %v704 = vmul.f32 %v700, %v328
    %705 = vadd.xlane.f32.xlu0 %v703
    %v706 = vpop.xlane.xlu0 %705
    %707 = vadd.xlane.f32.xlu0 %v704
    %v708 = vpop.xlane.xlu0 %707
    %v709 = vrot.slane %v706, 4
    %v710 = vmax.f32 %v706, %v709
    %v711 = vrot.slane %v710, 2
    %v712 = vmax.f32 %v710, %v711
    %v713 = vrot.slane %v712, 1
    %v714 = vmax.f32 %v712, %v713
    %v715 = vrot.slane %v708, 4
    %v716 = vmax.f32 %v708, %v715
    %v717 = vrot.slane %v716, 2
    %v718 = vmax.f32 %v716, %v717
    %v719 = vrot.slane %v718, 1
    %v720 = vmax.f32 %v718, %v719
    %v721 = vsub.f32 %v706, %v714
    %v722 = vsub.f32 %v708, %v720
    %v723 = vmul.f32 %v721, 1.442695
    %v724 = vpow.pop %v723
    %v725 = vmul.f32 %v722, 1.442695
    %v726 = vpow.pop %v725
    %v727 = vrot.slane %v724, 4
    %v728 = vadd.f32 %v724, %v727
    %v729 = vrot.slane %v728, 2
    %v730 = vadd.f32 %v728, %v729
    %v731 = vrot.slane %v730, 1
    %v732 = vadd.f32 %v730, %v731
    %v733 = vrot.slane %v726, 4
    %v734 = vadd.f32 %v726, %v733
    %v735 = vrot.slane %v734, 2
    %v736 = vadd.f32 %v734, %v735
    %v737 = vrot.slane %v736, 1
    %v738 = vadd.f32 %v736, %v737
    %v739 = vrcp.pop %v732
    %v740 = vrcp.pop %v738
    %v741 = vmul.f32 %v724, %v739
    %v742 = vmul.f32 %v726, %v740
    %v743 = vmul.f32 %v741, %v398
    %v744 = vmul.f32 %v742, %v403
    %v745 = vrot.slane %v743, 4
    %v746 = vadd.f32 %v743, %v745
    %v747 = vrot.slane %v746, 2
    %v748 = vadd.f32 %v746, %v747
    %v749 = vrot.slane %v748, 1
    %v750 = vadd.f32 %v748, %v749
    %v751 = vrot.slane %v744, 4
    %v752 = vadd.f32 %v744, %v751
    %v753 = vrot.slane %v752, 2
    %v754 = vadd.f32 %v752, %v753
    %v755 = vrot.slane %v754, 1
    %v756 = vadd.f32 %v754, %v755
    %v759 = vsel %vm597, %v756, %v750
    %761 = vmatprep.subr.mxu0 0.0
    %762 = vmatpush1.msra.mxu0 %v476
    %763 = vmatprep.subr.mxu0 0.0
    %764 = vmatpush1.msra.mxu0 %v477
    %765 = vmatprep.subr.mxu0 0.0
    %766 = vmatpush1.msra.mxu0 %v478
    %767 = vmatprep.subr.mxu0 0.0
    %768 = vmatpush1.msra.mxu0 %v479
    %769 = vmatprep.subr.mxu0 0.0
    %770 = vmatpush1.msra.mxu0 %v480
    %771 = vmatprep.subr.mxu0 0.0
    %772 = vmatpush1.msra.mxu0 %v481
    %773 = vmatprep.subr.mxu0 0.0
    %774 = vmatpush1.msra.mxu0 %v482
    %775 = vmatprep.subr.mxu0 0.0
    %776 = vmatpush1.msra.mxu0 %v483
    %777 = vmatprep.subr.mxu0 0.0
    %778 = vmatpush1.msra.mxu0 %v484
    %779 = vmatprep.subr.mxu0 0.0
    %780 = vmatpush1.msra.mxu0 %v485
    %781 = vmatprep.subr.mxu0 0.0
    %782 = vmatpush1.msra.mxu0 %v486
    %783 = vmatprep.subr.mxu0 0.0
    %784 = vmatpush1.msra.mxu0 %v487
    %785 = vmatprep.subr.mxu0 0.0
    %786 = vmatpush1.msra.mxu0 %v488
    %787 = vmatprep.subr.mxu0 0.0
    %788 = vmatpush1.msra.mxu0 %v489
    %789 = vmatprep.subr.mxu0 0.0
    %790 = vmatpush1.msra.mxu0 %v490
    %791 = vmatprep.subr.mxu0 0.0
    %792 = vmatpush1.msra.mxu0 %v491
    %793 = vmatprep.subr.mxu0 0.0
    %794 = vmatpush1.msra.mxu0 0.0
    %795 = vmatprep.subr.mxu0 0.0
    %796 = vmatpush1.msra.mxu0 0.0
    %797 = vmatprep.subr.mxu0 0.0
    %798 = vmatpush1.msra.mxu0 0.0
    %799 = vmatprep.subr.mxu0 0.0
    %800 = vmatpush1.msra.mxu0 0.0
    %801 = vmatprep.subr.mxu0 0.0
    %802 = vmatpush1.msra.mxu0 0.0
    %803 = vmatprep.subr.mxu0 0.0
    %804 = vmatpush1.msra.mxu0 0.0
    %805 = vmatprep.subr.mxu0 0.0
    %806 = vmatpush1.msra.mxu0 0.0
    %807 = vmatprep.subr.mxu0 0.0
    %808 = vmatpush1.msra.mxu0 0.0
    %809 = vmatprep.subr.mxu0 0.0
    %810 = vmatpush1.msra.mxu0 0.0
    %811 = vmatprep.subr.mxu0 0.0
    %812 = vmatpush1.msra.mxu0 0.0
    %813 = vmatprep.subr.mxu0 0.0
    %814 = vmatpush1.msra.mxu0 0.0
    %815 = vmatprep.subr.mxu0 0.0
    %816 = vmatpush1.msra.mxu0 0.0
    %817 = vmatprep.subr.mxu0 0.0
    %818 = vmatpush1.msra.mxu0 0.0
    %819 = vmatprep.subr.mxu0 0.0
    %820 = vmatpush1.msra.mxu0 0.0
    %821 = vmatprep.subr.mxu0 0.0
    %822 = vmatpush1.msra.mxu0 0.0
    %823 = vmatprep.subr.mxu0 0.0
    %824 = vmatpush1.msra.mxu0 0.0
    %825 = vmatprep.mubr.f32.mxu0 0.0
    %826 = vmatmul.mubr.f32.gmra.mrb[0].mxu0 %v667
    %v827 = vpop.f32.mrb[0].mxu0
    %v828 = vadd.f32 %v759, %v827
    %v829 = vpop.f32.mrb[0].mxu0
    %830 = vdwg.mxu0
    %v833 = vunpack.c.l.s4 1966171168
    %v834 = vunpack.c.0.s8 %v833
    %v835 = vlaneseq
    %v836 = vshrl.u32 %v835, 7
    %v837 = vsub.s32 %v834, %v836
    %v838 = vrot.slane %v828, %v837
    %v839 = vcombine.high %v838, %v838
    %v841 = vunpack.c.l.s4 1966171168
    %v842 = vunpack.c.0.s8 %v841
    %v843 = vlaneseq
    %v844 = vshrl.u32 %v843, 7
    %v845 = vsub.s32 %v842, %v844
    %v846 = vrot.slane %v838, %v845
    %v848 = vunpack.c.l.s4 1966171168
    %v849 = vunpack.c.0.s8 %v848
    %v850 = vlaneseq
    %v851 = vshrl.u32 %v850, 7
    %v852 = vsub.s32 %v849, %v851
    %v853 = vrot.slane %v839, %v852
    %v854 = vlaneseq
    %v855 = vshrl.u32 %v854, 7
    %v856 = vsub.s32 0, %v855
    %v857 = vrot.slane %v846, %v856
    %v858 = vlaneseq
    %v859 = vshrl.u32 %v858, 7
    %v860 = vsub.s32 0, %v859
    %v861 = vrot.slane %v853, %v860
    %v864 = vmul.f32 %v857, %v323
    %v865 = vmul.f32 %v861, %v328
    %866 = vadd.xlane.f32.xlu0 %v864
    %v867 = vpop.xlane.xlu0 %866
    %868 = vadd.xlane.f32.xlu0 %v865
    %v869 = vpop.xlane.xlu0 %868
    %v870 = vrot.slane %v867, 4
    %v871 = vmax.f32 %v867, %v870
    %v872 = vrot.slane %v871, 2
    %v873 = vmax.f32 %v871, %v872
    %v874 = vrot.slane %v873, 1
    %v875 = vmax.f32 %v873, %v874
    %v876 = vrot.slane %v869, 4
    %v877 = vmax.f32 %v869, %v876
    %v878 = vrot.slane %v877, 2
    %v879 = vmax.f32 %v877, %v878
    %v880 = vrot.slane %v879, 1
    %v881 = vmax.f32 %v879, %v880
    %v882 = vsub.f32 %v867, %v875
    %v883 = vsub.f32 %v869, %v881
    %v884 = vmul.f32 %v882, 1.442695
    %v885 = vpow.pop %v884
    %v886 = vmul.f32 %v883, 1.442695
    %v887 = vpow.pop %v886
    %v888 = vrot.slane %v885, 4
    %v889 = vadd.f32 %v885, %v888
    %v890 = vrot.slane %v889, 2
    %v891 = vadd.f32 %v889, %v890
    %v892 = vrot.slane %v891, 1
    %v893 = vadd.f32 %v891, %v892
    %v894 = vrot.slane %v887, 4
    %v895 = vadd.f32 %v887, %v894
    %v896 = vrot.slane %v895, 2
    %v897 = vadd.f32 %v895, %v896
    %v898 = vrot.slane %v897, 1
    %v899 = vadd.f32 %v897, %v898
    %v900 = vrcp.pop %v893
    %v901 = vrcp.pop %v899
    %v902 = vmul.f32 %v885, %v900
    %v903 = vmul.f32 %v887, %v901
    %v904 = vmul.f32 %v902, %v398
    %v905 = vmul.f32 %v903, %v403
    %v906 = vrot.slane %v904, 4
    %v907 = vadd.f32 %v904, %v906
    %v908 = vrot.slane %v907, 2
    %v909 = vadd.f32 %v907, %v908
    %v910 = vrot.slane %v909, 1
    %v911 = vadd.f32 %v909, %v910
    %v912 = vrot.slane %v905, 4
    %v913 = vadd.f32 %v905, %v912
    %v914 = vrot.slane %v913, 2
    %v915 = vadd.f32 %v913, %v914
    %v916 = vrot.slane %v915, 1
    %v917 = vadd.f32 %v915, %v916
    %v920 = vsel %vm597, %v917, %v911
    %922 = vmatprep.subr.mxu0 0.0
    %923 = vmatpush1.msra.mxu0 %v476
    %924 = vmatprep.subr.mxu0 0.0
    %925 = vmatpush1.msra.mxu0 %v477
    %926 = vmatprep.subr.mxu0 0.0
    %927 = vmatpush1.msra.mxu0 %v478
    %928 = vmatprep.subr.mxu0 0.0
    %929 = vmatpush1.msra.mxu0 %v479
    %930 = vmatprep.subr.mxu0 0.0
    %931 = vmatpush1.msra.mxu0 %v480
    %932 = vmatprep.subr.mxu0 0.0
    %933 = vmatpush1.msra.mxu0 %v481
    %934 = vmatprep.subr.mxu0 0.0
    %935 = vmatpush1.msra.mxu0 %v482
    %936 = vmatprep.subr.mxu0 0.0
    %937 = vmatpush1.msra.mxu0 %v483
    %938 = vmatprep.subr.mxu0 0.0
    %939 = vmatpush1.msra.mxu0 %v484
    %940 = vmatprep.subr.mxu0 0.0
    %941 = vmatpush1.msra.mxu0 %v485
    %942 = vmatprep.subr.mxu0 0.0
    %943 = vmatpush1.msra.mxu0 %v486
    %944 = vmatprep.subr.mxu0 0.0
    %945 = vmatpush1.msra.mxu0 %v487
    %946 = vmatprep.subr.mxu0 0.0
    %947 = vmatpush1.msra.mxu0 %v488
    %948 = vmatprep.subr.mxu0 0.0
    %949 = vmatpush1.msra.mxu0 %v489
    %950 = vmatprep.subr.mxu0 0.0
    %951 = vmatpush1.msra.mxu0 %v490
    %952 = vmatprep.subr.mxu0 0.0
    %953 = vmatpush1.msra.mxu0 %v491
    %954 = vmatprep.subr.mxu0 0.0
    %955 = vmatpush1.msra.mxu0 0.0
    %956 = vmatprep.subr.mxu0 0.0
    %957 = vmatpush1.msra.mxu0 0.0
    %958 = vmatprep.subr.mxu0 0.0
    %959 = vmatpush1.msra.mxu0 0.0
    %960 = vmatprep.subr.mxu0 0.0
    %961 = vmatpush1.msra.mxu0 0.0
    %962 = vmatprep.subr.mxu0 0.0
    %963 = vmatpush1.msra.mxu0 0.0
    %964 = vmatprep.subr.mxu0 0.0
    %965 = vmatpush1.msra.mxu0 0.0
    %966 = vmatprep.subr.mxu0 0.0
    %967 = vmatpush1.msra.mxu0 0.0
    %968 = vmatprep.subr.mxu0 0.0
    %969 = vmatpush1.msra.mxu0 0.0
    %970 = vmatprep.subr.mxu0 0.0
    %971 = vmatpush1.msra.mxu0 0.0
    %972 = vmatprep.subr.mxu0 0.0
    %973 = vmatpush1.msra.mxu0 0.0
    %974 = vmatprep.subr.mxu0 0.0
    %975 = vmatpush1.msra.mxu0 0.0
    %976 = vmatprep.subr.mxu0 0.0
    %977 = vmatpush1.msra.mxu0 0.0
    %978 = vmatprep.subr.mxu0 0.0
    %979 = vmatpush1.msra.mxu0 0.0
    %980 = vmatprep.subr.mxu0 0.0
    %981 = vmatpush1.msra.mxu0 0.0
    %982 = vmatprep.subr.mxu0 0.0
    %983 = vmatpush1.msra.mxu0 0.0
    %984 = vmatprep.subr.mxu0 0.0
    %985 = vmatpush1.msra.mxu0 0.0
    %986 = vmatprep.mubr.f32.mxu0 0.0
    %987 = vmatmul.mubr.f32.gmra.mrb[0].mxu0 %v828
    %v988 = vpop.f32.mrb[0].mxu0
    %v989 = vadd.f32 %v920, %v988
    %v990 = vpop.f32.mrb[0].mxu0
    %991 = vdwg.mxu0
    %992 = vmatprep.subr.mxu0 0.0
    %993 = vmatpush1.msra.mxu0 %v492
    %994 = vmatprep.subr.mxu0 0.0
    %995 = vmatpush1.msra.mxu0 %v493
    %996 = vmatprep.subr.mxu0 0.0
    %997 = vmatpush1.msra.mxu0 %v494
    %998 = vmatprep.subr.mxu0 0.0
    %999 = vmatpush1.msra.mxu0 %v495
    %1000 = vmatprep.subr.mxu0 0.0
    %1001 = vmatpush1.msra.mxu0 %v496
    %1002 = vmatprep.subr.mxu0 0.0
    %1003 = vmatpush1.msra.mxu0 %v497
    %1004 = vmatprep.subr.mxu0 0.0
    %1005 = vmatpush1.msra.mxu0 %v498
    %1006 = vmatprep.subr.mxu0 0.0
    %1007 = vmatpush1.msra.mxu0 %v499
    %1008 = vmatprep.subr.mxu0 0.0
    %1009 = vmatpush1.msra.mxu0 %v500
    %1010 = vmatprep.subr.mxu0 0.0
    %1011 = vmatpush1.msra.mxu0 %v501
    %1012 = vmatprep.subr.mxu0 0.0
    %1013 = vmatpush1.msra.mxu0 %v502
    %1014 = vmatprep.subr.mxu0 0.0
    %1015 = vmatpush1.msra.mxu0 %v503
    %1016 = vmatprep.subr.mxu0 0.0
    %1017 = vmatpush1.msra.mxu0 %v504
    %1018 = vmatprep.subr.mxu0 0.0
    %1019 = vmatpush1.msra.mxu0 %v505
    %1020 = vmatprep.subr.mxu0 0.0
    %1021 = vmatpush1.msra.mxu0 %v506
    %1022 = vmatprep.subr.mxu0 0.0
    %1023 = vmatpush1.msra.mxu0 %v507
    %1024 = vmatprep.subr.mxu0 0.0
    %1025 = vmatpush1.msra.mxu0 0.0
    %1026 = vmatprep.subr.mxu0 0.0
    %1027 = vmatpush1.msra.mxu0 0.0
    %1028 = vmatprep.subr.mxu0 0.0
    %1029 = vmatpush1.msra.mxu0 0.0
    %1030 = vmatprep.subr.mxu0 0.0
    %1031 = vmatpush1.msra.mxu0 0.0
    %1032 = vmatprep.subr.mxu0 0.0
    %1033 = vmatpush1.msra.mxu0 0.0
    %1034 = vmatprep.subr.mxu0 0.0
    %1035 = vmatpush1.msra.mxu0 0.0
    %1036 = vmatprep.subr.mxu0 0.0
    %1037 = vmatpush1.msra.mxu0 0.0
    %1038 = vmatprep.subr.mxu0 0.0
    %1039 = vmatpush1.msra.mxu0 0.0
    %1040 = vmatprep.subr.mxu0 0.0
    %1041 = vmatpush1.msra.mxu0 0.0
    %1042 = vmatprep.subr.mxu0 0.0
    %1043 = vmatpush1.msra.mxu0 0.0
    %1044 = vmatprep.subr.mxu0 0.0
    %1045 = vmatpush1.msra.mxu0 0.0
    %1046 = vmatprep.subr.mxu0 0.0
    %1047 = vmatpush1.msra.mxu0 0.0
    %1048 = vmatprep.subr.mxu0 0.0
    %1049 = vmatpush1.msra.mxu0 0.0
    %1050 = vmatprep.subr.mxu0 0.0
    %1051 = vmatpush1.msra.mxu0 0.0
    %1052 = vmatprep.subr.mxu0 0.0
    %1053 = vmatpush1.msra.mxu0 0.0
    %1054 = vmatprep.subr.mxu0 0.0
    %1055 = vmatpush1.msra.mxu0 0.0
    %1056 = vmatprep.mubr.f32.mxu0 0.0
    %1057 = vmatmul.mubr.f32.gmra.mrb[0].mxu0 %v989
    %v1058 = vpop.f32.mrb[0].mxu0
    %v1059 = vadd.f32 0.0, %v1058
    %v1060 = vpop.f32.mrb[0].mxu0
    %1061 = vdwg.mxu0
    %1062 = vst [vmem:[#allocation11] sm:$0x3] %v1059
    // Predicated region
    $region50: #{tpu_custom_call.1} parent=1 // pred_check
      _
    $region51: #{tpu_custom_call.1} parent=1 // pred_check_branch
      %1064 = sbr.rel (0) target = $region53
    $region52: #{tpu_custom_call.1} parent=1 // pred_region
      %s1066 = ssub.s32 32, 32
      %1067 = vsyncadd [#allocation4], %s1066
      %s1069 = sshll.u32 [#allocation11], 4
      %s1070 = int_to_ptr.vmem [resolvable:$true] %s1069
      %1072 = dma.vmem_to_hbm [thread:$0]  %s1070, 32, %s7, [#allocation4]
    $region53: #{tpu_custom_call.1} parent=1 // pred_fallthru
      _
    // Predicated region
    $region54: #{tpu_custom_call.1} parent=1 // pred_check
      _
    $region55: #{tpu_custom_call.1} parent=1 // pred_check_branch
      %1074 = sbr.rel (0) target = $region57
    $region56: #{tpu_custom_call.1} parent=1 // pred_region
      %1075 = dma.done [#allocation4], 32
    $region57: #{tpu_custom_call.1} parent=1 // pred_fallthru
      _
    %1076 = vsyncpa [#allocation3], 1
    %1077 = vsyncpa [#allocation6], 1
    %1078 = vsyncpa [#allocation9], 1
    %1079 = vsyncpa [#allocation4], 1

</llo_original>
